<compile_context>
chip_gen: v5e
topology: v5e:2x2
jax: 0.10.0
libtpu: 0.0.40
codegen_flags: <defaults>
</compile_context>

<pallas_src>
import jax
import jax.numpy as jnp
from jax.experimental import pallas as pl
from jax.experimental.pallas import tpu as pltpu


def _round_up(x, m):
    return ((x + m - 1) // m) * m


def classifier_kernel(x_ref,
                      w1_ref, b1_ref,
                      w2_ref, b2_ref,
                      w3_ref, b3_ref,
                      w4_ref, b4_ref,
                      w5_ref, b5_ref,
                      o_ref):
    # x_ref: (TB, 10) f32; w*_ref: bf16 (in, out); b*_ref: f32 (1, out);
    # o_ref: (TB, out_classes) f32.
    def hidden_layer(h_lo, w_ref, b_ref):
        z = jnp.dot(h_lo, w_ref[...], preferred_element_type=jnp.float32) + b_ref[...]
        # bias / ReLU in f32 (v5e VPU has no bf16 path); bf16 only for the MXU feed.
        return jnp.maximum(z, 0.0).astype(jnp.bfloat16)

    h = x_ref[...].astype(jnp.bfloat16)      # in-kernel cast, hidden under the DMA
    h = hidden_layer(h, w1_ref, b1_ref)      # (TB, 128)
    h = hidden_layer(h, w2_ref, b2_ref)      # (TB, 64)
    h = hidden_layer(h, w3_ref, b3_ref)      # (TB, 32)
    h = hidden_layer(h, w4_ref, b4_ref)      # (TB, 16)

    logits = (jnp.dot(h, w5_ref[...], preferred_element_type=jnp.float32)
              + b5_ref[...])                 # (TB, out_classes) f32

    m = jnp.max(logits, axis=-1, keepdims=True)
    e = jnp.exp(logits - m)
    denom = jnp.sum(e, axis=-1, keepdims=True)
    o_ref[...] = (e / denom).astype(o_ref.dtype)   # narrow (TB, out_classes) store


def classifier_forward(x, params, *, batch_tile=4096):
    """x: (B, 10) float32; params: list of (W(in,out) f32, b(1,out) f32)."""
    B, F = x.shape
    out_classes = params[-1][0].shape[1]

    # bf16 weights for the MXU (tiny one-time cast); biases stay f32.
    flat_args = []
    for w, b in params:
        flat_args.append(w.astype(jnp.bfloat16))
        flat_args.append(b.astype(jnp.float32))

    # Batch tile: multiples of 16 (bf16 packs 16 rows per sublane group).  Real HBM
    # traffic is only ~60 B/row, so big tiles amortize the per-grid-step overhead.
    tb = _round_up(max(16, min(batch_tile, B)), 16)
    grid = (pl.cdiv(B, tb),)   # ragged last block: OOB output rows are not written

    in_specs = [pl.BlockSpec((tb, F), lambda i: (i, 0))]
    for w, b in params:
        in_specs.append(pl.BlockSpec(w.shape, lambda i: (0, 0)))  # VMEM-resident
        in_specs.append(pl.BlockSpec(b.shape, lambda i: (0, 0)))
    out_spec = pl.BlockSpec((tb, out_classes), lambda i: (i, 0))

    flops = 2 * B * sum(w.shape[0] * w.shape[1] for w, _ in params)
    bytes_accessed = (x.size * 4                          # f32 x stream
                      + B * out_classes * 4               # narrow f32 output
                      + sum(w.size * 2 + b.size * 4 for w, b in params))
    cost = pl.CostEstimate(flops=flops,
                           transcendentals=B * out_classes,
                           bytes_accessed=bytes_accessed)

    return pl.pallas_call(
        classifier_kernel,
        out_shape=jax.ShapeDtypeStruct((B, out_classes), jnp.float32),
        grid=grid,
        in_specs=in_specs,
        out_specs=out_spec,
        compiler_params=pltpu.CompilerParams(
            dimension_semantics=("parallel",),
            vmem_limit_bytes=32 * 1024 * 1024),
        cost_estimate=cost,
    )(x, *flat_args)


def init_params(key):
    """Deterministic param init matching the PyTorch layer shapes.

    PyTorch Linear(in, out) has weight (out, in); we store (in, out)."""
    dims = [(10, 128), (128, 64), (64, 32), (32, 16), (16, 5)]
    params = []
    for (fan_in, fan_out) in dims:
        key, kw, kb = jax.random.split(key, 3)
        bound = 1.0 / (fan_in ** 0.5)
        w = jax.random.uniform(kw, (fan_in, fan_out), jnp.float32, -bound, bound)
        b = jax.random.uniform(kb, (1, fan_out), jnp.float32, -bound, bound)
        params.append((w, b))
    return params


def reference_forward_f32(x, params):
    h = x
    for i, (w, b) in enumerate(params):
        h = h @ w + b
        if i < len(params) - 1:
            h = jnp.maximum(h, 0.0)
    return jax.nn.softmax(h, axis=-1)


def reference_forward_bf16(x, params):
    """Pure-JAX reference mirroring the kernel numerics (bf16 MXU inputs,
    f32 accumulation / bias / ReLU / softmax)."""
    h = x.astype(jnp.bfloat16)
    z = None
    for i, (w, b) in enumerate(params):
        z = jnp.dot(h, w.astype(jnp.bfloat16),
                    preferred_element_type=jnp.float32) + b
        if i < len(params) - 1:
            h = jnp.maximum(z, 0.0).astype(jnp.bfloat16)
    return jax.nn.softmax(z, axis=-1)


if __name__ == "__main__":
    key = jax.random.PRNGKey(0)
    key, kx = jax.random.split(key)

    B, F = 8, 10
    x = jax.random.normal(kx, (B, F), dtype=jnp.float32)
    params = init_params(key)

    out = jax.block_until_ready(classifier_forward(x, params))
    assert out.shape == (B, 5)

    ref_bf16 = reference_forward_bf16(x, params)
    ref_f32 = reference_forward_f32(x, params)
    assert jnp.allclose(out, ref_bf16, atol=1e-4, rtol=1e-4), "mismatch vs bf16 reference"
    assert jnp.allclose(out, ref_f32, atol=3e-2, rtol=3e-2), "mismatch vs f32 reference"
    assert jnp.allclose(jnp.sum(out, axis=-1), 1.0, atol=1e-5)

    # Exercise multi-block grid + ragged last tile (no wrapper padding or slicing).
    key, kx2 = jax.random.split(key)
    x2 = jax.random.normal(kx2, (37, F), dtype=jnp.float32)
    out2 = jax.block_until_ready(classifier_forward(x2, params, batch_tile=16))
    ref2 = reference_forward_bf16(x2, params)
    assert out2.shape == (37, 5)
    assert jnp.allclose(out2, ref2, atol=1e-4, rtol=1e-4), "mismatch on ragged/tiled batch"
    assert jnp.allclose(jnp.sum(out2, axis=-1), 1.0, atol=1e-5)

    print("KERNEL_OK")
</pallas_src>

<mosaic_0001>
module attributes {stable_mosaic.version = 11 : i64} {
  func.func @classifier_kernel(%arg0: i32, %arg1: memref<16x10xf32, #tpu.memory_space<vmem>>, %arg2: memref<10x128xbf16, #tpu.memory_space<vmem>>, %arg3: memref<1x128xf32, #tpu.memory_space<vmem>>, %arg4: memref<128x64xbf16, #tpu.memory_space<vmem>>, %arg5: memref<1x64xf32, #tpu.memory_space<vmem>>, %arg6: memref<64x32xbf16, #tpu.memory_space<vmem>>, %arg7: memref<1x32xf32, #tpu.memory_space<vmem>>, %arg8: memref<32x16xbf16, #tpu.memory_space<vmem>>, %arg9: memref<1x16xf32, #tpu.memory_space<vmem>>, %arg10: memref<16x5xbf16, #tpu.memory_space<vmem>>, %arg11: memref<1x5xf32, #tpu.memory_space<vmem>>, %arg12: memref<16x5xf32, #tpu.memory_space<vmem>>) attributes {dimension_semantics = [#tpu.dimension_semantics<parallel>], iteration_bounds = array<i64: 1>, scalar_prefetch = 0 : i64, scratch_operands = 0 : i64, tpu.core_type = #tpu.core_type<tc>, window_params = [{transform_indices = @transform_0, window_bounds = array<i64: 16, 10>}, {pipeline_mode = #tpu.pipeline_mode<synchronous>, transform_indices = @transform_1, window_bounds = array<i64: 10, 128>}, {pipeline_mode = #tpu.pipeline_mode<synchronous>, transform_indices = @transform_2, window_bounds = array<i64: 1, 128>}, {pipeline_mode = #tpu.pipeline_mode<synchronous>, transform_indices = @transform_3, window_bounds = array<i64: 128, 64>}, {pipeline_mode = #tpu.pipeline_mode<synchronous>, transform_indices = @transform_4, window_bounds = array<i64: 1, 64>}, {pipeline_mode = #tpu.pipeline_mode<synchronous>, transform_indices = @transform_5, window_bounds = array<i64: 64, 32>}, {pipeline_mode = #tpu.pipeline_mode<synchronous>, transform_indices = @transform_6, window_bounds = array<i64: 1, 32>}, {pipeline_mode = #tpu.pipeline_mode<synchronous>, transform_indices = @transform_7, window_bounds = array<i64: 32, 16>}, {pipeline_mode = #tpu.pipeline_mode<synchronous>, transform_indices = @transform_8, window_bounds = array<i64: 1, 16>}, {pipeline_mode = #tpu.pipeline_mode<synchronous>, transform_indices = @transform_9, window_bounds = array<i64: 16, 5>}, {pipeline_mode = #tpu.pipeline_mode<synchronous>, transform_indices = @transform_10, window_bounds = array<i64: 1, 5>}, {transform_indices = @transform_11, window_bounds = array<i64: 16, 5>}]} {
    %c0 = arith.constant 0 : index
    %c0_0 = arith.constant 0 : index
    %0 = vector.load %arg1[%c0, %c0_0] : memref<16x10xf32, #tpu.memory_space<vmem>>, vector<16x10xf32>
    %1 = arith.truncf %0 : vector<16x10xf32> to vector<16x10xbf16>
    %c0_1 = arith.constant 0 : index
    %c0_2 = arith.constant 0 : index
    %2 = vector.load %arg2[%c0_1, %c0_2] : memref<10x128xbf16, #tpu.memory_space<vmem>>, vector<10x128xbf16>
    %cst = arith.constant dense<0.000000e+00> : vector<16x128xf32>
    %3 = tpu.matmul %1, %2, %cst {dimension_numbers = #tpu.dot_dimension_numbers<[1], [0], [0], [1], [0, 0, 1, 1], [], []>} : vector<16x10xbf16>, vector<10x128xbf16>, vector<16x128xf32> -> vector<16x128xf32>
    %c0_3 = arith.constant 0 : index
    %c0_4 = arith.constant 0 : index
    %4 = vector.load %arg3[%c0_3, %c0_4] : memref<1x128xf32, #tpu.memory_space<vmem>>, vector<1x128xf32>
    %5 = vector.broadcast %4 : vector<1x128xf32> to vector<16x128xf32>
    %6 = arith.addf %3, %5 : vector<16x128xf32>
    %cst_5 = arith.constant 0.000000e+00 : f32
    %7 = vector.broadcast %cst_5 : f32 to vector<16x128xf32>
    %8 = arith.maximumf %6, %7 : vector<16x128xf32>
    %9 = arith.truncf %8 : vector<16x128xf32> to vector<16x128xbf16>
    %c0_6 = arith.constant 0 : index
    %c0_7 = arith.constant 0 : index
    %10 = vector.load %arg4[%c0_6, %c0_7] : memref<128x64xbf16, #tpu.memory_space<vmem>>, vector<128x64xbf16>
    %cst_8 = arith.constant dense<0.000000e+00> : vector<16x64xf32>
    %11 = tpu.matmul %9, %10, %cst_8 {dimension_numbers = #tpu.dot_dimension_numbers<[1], [0], [0], [1], [0, 0, 1, 1], [], []>} : vector<16x128xbf16>, vector<128x64xbf16>, vector<16x64xf32> -> vector<16x64xf32>
    %c0_9 = arith.constant 0 : index
    %c0_10 = arith.constant 0 : index
    %12 = vector.load %arg5[%c0_9, %c0_10] : memref<1x64xf32, #tpu.memory_space<vmem>>, vector<1x64xf32>
    %13 = vector.broadcast %12 : vector<1x64xf32> to vector<16x64xf32>
    %14 = arith.addf %11, %13 : vector<16x64xf32>
    %cst_11 = arith.constant 0.000000e+00 : f32
    %15 = vector.broadcast %cst_11 : f32 to vector<16x64xf32>
    %16 = arith.maximumf %14, %15 : vector<16x64xf32>
    %17 = arith.truncf %16 : vector<16x64xf32> to vector<16x64xbf16>
    %c0_12 = arith.constant 0 : index
    %c0_13 = arith.constant 0 : index
    %18 = vector.load %arg6[%c0_12, %c0_13] : memref<64x32xbf16, #tpu.memory_space<vmem>>, vector<64x32xbf16>
    %cst_14 = arith.constant dense<0.000000e+00> : vector<16x32xf32>
    %19 = tpu.matmul %17, %18, %cst_14 {dimension_numbers = #tpu.dot_dimension_numbers<[1], [0], [0], [1], [0, 0, 1, 1], [], []>} : vector<16x64xbf16>, vector<64x32xbf16>, vector<16x32xf32> -> vector<16x32xf32>
    %c0_15 = arith.constant 0 : index
    %c0_16 = arith.constant 0 : index
    %20 = vector.load %arg7[%c0_15, %c0_16] : memref<1x32xf32, #tpu.memory_space<vmem>>, vector<1x32xf32>
    %21 = vector.broadcast %20 : vector<1x32xf32> to vector<16x32xf32>
    %22 = arith.addf %19, %21 : vector<16x32xf32>
    %cst_17 = arith.constant 0.000000e+00 : f32
    %23 = vector.broadcast %cst_17 : f32 to vector<16x32xf32>
    %24 = arith.maximumf %22, %23 : vector<16x32xf32>
    %25 = arith.truncf %24 : vector<16x32xf32> to vector<16x32xbf16>
    %c0_18 = arith.constant 0 : index
    %c0_19 = arith.constant 0 : index
    %26 = vector.load %arg8[%c0_18, %c0_19] : memref<32x16xbf16, #tpu.memory_space<vmem>>, vector<32x16xbf16>
    %cst_20 = arith.constant dense<0.000000e+00> : vector<16x16xf32>
    %27 = tpu.matmul %25, %26, %cst_20 {dimension_numbers = #tpu.dot_dimension_numbers<[1], [0], [0], [1], [0, 0, 1, 1], [], []>} : vector<16x32xbf16>, vector<32x16xbf16>, vector<16x16xf32> -> vector<16x16xf32>
    %c0_21 = arith.constant 0 : index
    %c0_22 = arith.constant 0 : index
    %28 = vector.load %arg9[%c0_21, %c0_22] : memref<1x16xf32, #tpu.memory_space<vmem>>, vector<1x16xf32>
    %29 = vector.broadcast %28 : vector<1x16xf32> to vector<16x16xf32>
    %30 = arith.addf %27, %29 : vector<16x16xf32>
    %cst_23 = arith.constant 0.000000e+00 : f32
    %31 = vector.broadcast %cst_23 : f32 to vector<16x16xf32>
    %32 = arith.maximumf %30, %31 : vector<16x16xf32>
    %33 = arith.truncf %32 : vector<16x16xf32> to vector<16x16xbf16>
    %c0_24 = arith.constant 0 : index
    %c0_25 = arith.constant 0 : index
    %34 = vector.load %arg10[%c0_24, %c0_25] : memref<16x5xbf16, #tpu.memory_space<vmem>>, vector<16x5xbf16>
    %cst_26 = arith.constant dense<0.000000e+00> : vector<16x5xf32>
    %35 = tpu.matmul %33, %34, %cst_26 {dimension_numbers = #tpu.dot_dimension_numbers<[1], [0], [0], [1], [0, 0, 1, 1], [], []>} : vector<16x16xbf16>, vector<16x5xbf16>, vector<16x5xf32> -> vector<16x5xf32>
    %c0_27 = arith.constant 0 : index
    %c0_28 = arith.constant 0 : index
    %36 = vector.load %arg11[%c0_27, %c0_28] : memref<1x5xf32, #tpu.memory_space<vmem>>, vector<1x5xf32>
    %37 = vector.broadcast %36 : vector<1x5xf32> to vector<16x5xf32>
    %38 = arith.addf %35, %37 : vector<16x5xf32>
    %cst_29 = arith.constant dense<0xFF800000> : vector<16xf32>
    %39 = vector.multi_reduction <maximumf>, %38, %cst_29 [1] : vector<16x5xf32> to vector<16xf32>
    %40 = vector.shape_cast %39 : vector<16xf32> to vector<16x1xf32>
    %41 = vector.broadcast %40 : vector<16x1xf32> to vector<16x5xf32>
    %42 = arith.subf %38, %41 : vector<16x5xf32>
    %43 = math.exp %42 : vector<16x5xf32>
    %cst_30 = arith.constant dense<0.000000e+00> : vector<16xf32>
    %44 = vector.multi_reduction <add>, %43, %cst_30 [1] : vector<16x5xf32> to vector<16xf32>
    %45 = vector.shape_cast %44 : vector<16xf32> to vector<16x1xf32>
    %46 = vector.broadcast %45 : vector<16x1xf32> to vector<16x5xf32>
    %47 = arith.divf %43, %46 : vector<16x5xf32>
    %c0_31 = arith.constant 0 : index
    %c0_32 = arith.constant 0 : index
    %48 = vector.load %arg12[%c0_31, %c0_32] : memref<16x5xf32, #tpu.memory_space<vmem>>, vector<16x5xf32>
    tpu.vector_store %arg12[%c0_31, %c0_32], %47 {strides = array<i32>} : memref<16x5xf32, #tpu.memory_space<vmem>>, vector<16x5xf32>,
    return
  }
  func.func @transform_0(%arg0: i32) -> (i32, i32) {
    %c0_i32 = arith.constant 0 : i32
    %c0_i32_0 = arith.constant 0 : i32
    return %arg0, %c0_i32 : i32, i32
  }
  func.func @transform_1(%arg0: i32) -> (i32, i32) {
    %c0_i32 = arith.constant 0 : i32
    %c0_i32_0 = arith.constant 0 : i32
    %c0_i32_1 = arith.constant 0 : i32
    return %c0_i32, %c0_i32_0 : i32, i32
  }
  func.func @transform_2(%arg0: i32) -> (i32, i32) {
    %c0_i32 = arith.constant 0 : i32
    %c0_i32_0 = arith.constant 0 : i32
    %c0_i32_1 = arith.constant 0 : i32
    return %c0_i32, %c0_i32_0 : i32, i32
  }
  func.func @transform_3(%arg0: i32) -> (i32, i32) {
    %c0_i32 = arith.constant 0 : i32
    %c0_i32_0 = arith.constant 0 : i32
    %c0_i32_1 = arith.constant 0 : i32
    return %c0_i32, %c0_i32_0 : i32, i32
  }
  func.func @transform_4(%arg0: i32) -> (i32, i32) {
    %c0_i32 = arith.constant 0 : i32
    %c0_i32_0 = arith.constant 0 : i32
    %c0_i32_1 = arith.constant 0 : i32
    return %c0_i32, %c0_i32_0 : i32, i32
  }
  func.func @transform_5(%arg0: i32) -> (i32, i32) {
    %c0_i32 = arith.constant 0 : i32
    %c0_i32_0 = arith.constant 0 : i32
    %c0_i32_1 = arith.constant 0 : i32
    return %c0_i32, %c0_i32_0 : i32, i32
  }
  func.func @transform_6(%arg0: i32) -> (i32, i32) {
    %c0_i32 = arith.constant 0 : i32
    %c0_i32_0 = arith.constant 0 : i32
    %c0_i32_1 = arith.constant 0 : i32
    return %c0_i32, %c0_i32_0 : i32, i32
  }
  func.func @transform_7(%arg0: i32) -> (i32, i32) {
    %c0_i32 = arith.constant 0 : i32
    %c0_i32_0 = arith.constant 0 : i32
    %c0_i32_1 = arith.constant 0 : i32
    return %c0_i32, %c0_i32_0 : i32, i32
  }
  func.func @transform_8(%arg0: i32) -> (i32, i32) {
    %c0_i32 = arith.constant 0 : i32
    %c0_i32_0 = arith.constant 0 : i32
    %c0_i32_1 = arith.constant 0 : i32
    return %c0_i32, %c0_i32_0 : i32, i32
  }
  func.func @transform_9(%arg0: i32) -> (i32, i32) {
    %c0_i32 = arith.constant 0 : i32
    %c0_i32_0 = arith.constant 0 : i32
    %c0_i32_1 = arith.constant 0 : i32
    return %c0_i32, %c0_i32_0 : i32, i32
  }
  func.func @transform_10(%arg0: i32) -> (i32, i32) {
    %c0_i32 = arith.constant 0 : i32
    %c0_i32_0 = arith.constant 0 : i32
    %c0_i32_1 = arith.constant 0 : i32
    return %c0_i32, %c0_i32_0 : i32, i32
  }
  func.func @transform_11(%arg0: i32) -> (i32, i32) {
    %c0_i32 = arith.constant 0 : i32
    %c0_i32_0 = arith.constant 0 : i32
    return %arg0, %c0_i32 : i32, i32
  }
}

</mosaic_0001>

<llo_original>
// kernel: tpu_custom_call.1
$region0: #{tpu_custom_call.1}
  #allocation0 [shape = 'u32[]', space=smem, size = 0x4, offset = 0x4, fixed_abs, tag = 'smem constant byte address 0x4 - core index']
  #allocation1 [shape = 'u32[72,128]{1,0:T(1,128)}', space=vmem, size = 0x9000, scoped, tag = 'internal scratch']
  %s0 = inlined_call_operand.vmem [shape: f32[8,10], index: 0, kind: input, shape index: {}]
  %s1 = inlined_call_operand.vmem [shape: bf16[10,128], index: 1, kind: input, shape index: {}]
  %s2 = inlined_call_operand.vmem [shape: f32[1,128], index: 2, kind: input, shape index: {}]
  %s3 = inlined_call_operand.vmem [shape: bf16[128,64], index: 3, kind: input, shape index: {}]
  %s4 = inlined_call_operand.vmem [shape: f32[1,64], index: 4, kind: input, shape index: {}]
  %s5 = inlined_call_operand.vmem [shape: bf16[64,32], index: 5, kind: input, shape index: {}]
  %s6 = inlined_call_operand.vmem [shape: f32[1,32], index: 6, kind: input, shape index: {}]
  %s7 = inlined_call_operand.vmem [shape: bf16[32,16], index: 7, kind: input, shape index: {}]
  %s8 = inlined_call_operand.vmem [shape: f32[1,16], index: 8, kind: input, shape index: {}]
  %s9 = inlined_call_operand.vmem [shape: bf16[16,5], index: 9, kind: input, shape index: {}]
  %s10 = inlined_call_operand.vmem [shape: f32[1,5], index: 10, kind: input, shape index: {}]
  %s11 = inlined_call_operand.hbm [shape: f32[8,5], index: 11, kind: output, shape index: {}]
  %s12 = sld [smem:[#allocation0]]
  $region54: #{tpu_custom_call.1} parent=0
    _
  %s14 = ssub.s32 1, %s12
  %s15 = scalar_select 0, %s14, %s12
  $region1: #{tpu_custom_call.1} parent=0
    #allocation2 [shape = 'u8[8192]{0}', space=vmem, size = 0x2000, scoped, tag = 'output window, operand 0, single buffered']
    #allocation3 [shape = 's32[1]{0}', space=sflag, size = 0x4, scoped, tag = 'scoped memory for tpu_custom_call.1']
    %16 = vsyncpa [#allocation3], 0
    // Predicated region
    $region2: #{tpu_custom_call.1} parent=1 // pred_check
      _
    $region3: #{tpu_custom_call.1} parent=1 // pred_check_branch
      %18 = sbr.rel (0) target = $region5
    $region4: #{tpu_custom_call.1} parent=1 // pred_region
      _
    $region5: #{tpu_custom_call.1} parent=1 // pred_fallthru
      _
    // Predicated region
    $region6: #{tpu_custom_call.1} parent=1 // pred_check
      _
    $region7: #{tpu_custom_call.1} parent=1 // pred_check_branch
      %20 = sbr.rel (0) target = $region9
    $region8: #{tpu_custom_call.1} parent=1 // pred_region
      _
    $region9: #{tpu_custom_call.1} parent=1 // pred_fallthru
      _
    // Predicated region
    $region10: #{tpu_custom_call.1} parent=1 // pred_check
      _
    $region11: #{tpu_custom_call.1} parent=1 // pred_check_branch
      %22 = sbr.rel (0) target = $region13
    $region12: #{tpu_custom_call.1} parent=1 // pred_region
      _
    $region13: #{tpu_custom_call.1} parent=1 // pred_fallthru
      _
    // Predicated region
    $region14: #{tpu_custom_call.1} parent=1 // pred_check
      _
    $region15: #{tpu_custom_call.1} parent=1 // pred_check_branch
      %24 = sbr.rel (0) target = $region17
    $region16: #{tpu_custom_call.1} parent=1 // pred_region
      _
    $region17: #{tpu_custom_call.1} parent=1 // pred_fallthru
      _
    // Predicated region
    $region18: #{tpu_custom_call.1} parent=1 // pred_check
      _
    $region19: #{tpu_custom_call.1} parent=1 // pred_check_branch
      %26 = sbr.rel (0) target = $region21
    $region20: #{tpu_custom_call.1} parent=1 // pred_region
      _
    $region21: #{tpu_custom_call.1} parent=1 // pred_fallthru
      _
    // Predicated region
    $region22: #{tpu_custom_call.1} parent=1 // pred_check
      _
    $region23: #{tpu_custom_call.1} parent=1 // pred_check_branch
      %28 = sbr.rel (0) target = $region25
    $region24: #{tpu_custom_call.1} parent=1 // pred_region
      _
    $region25: #{tpu_custom_call.1} parent=1 // pred_fallthru
      _
    // Predicated region
    $region26: #{tpu_custom_call.1} parent=1 // pred_check
      _
    $region27: #{tpu_custom_call.1} parent=1 // pred_check_branch
      %30 = sbr.rel (0) target = $region29
    $region28: #{tpu_custom_call.1} parent=1 // pred_region
      _
    $region29: #{tpu_custom_call.1} parent=1 // pred_fallthru
      _
    // Predicated region
    $region30: #{tpu_custom_call.1} parent=1 // pred_check
      _
    $region31: #{tpu_custom_call.1} parent=1 // pred_check_branch
      %32 = sbr.rel (0) target = $region33
    $region32: #{tpu_custom_call.1} parent=1 // pred_region
      _
    $region33: #{tpu_custom_call.1} parent=1 // pred_fallthru
      _
    // Predicated region
    $region34: #{tpu_custom_call.1} parent=1 // pred_check
      _
    $region35: #{tpu_custom_call.1} parent=1 // pred_check_branch
      %34 = sbr.rel (0) target = $region37
    $region36: #{tpu_custom_call.1} parent=1 // pred_region
      _
    $region37: #{tpu_custom_call.1} parent=1 // pred_fallthru
      _
    // Predicated region
    $region38: #{tpu_custom_call.1} parent=1 // pred_check
      _
    $region39: #{tpu_custom_call.1} parent=1 // pred_check_branch
      %36 = sbr.rel (0) target = $region41
    $region40: #{tpu_custom_call.1} parent=1 // pred_region
      _
    $region41: #{tpu_custom_call.1} parent=1 // pred_fallthru
      _
    // Predicated region
    $region42: #{tpu_custom_call.1} parent=1 // pred_check
      _
    $region43: #{tpu_custom_call.1} parent=1 // pred_check_branch
      %38 = sbr.rel (0) target = $region45
    $region44: #{tpu_custom_call.1} parent=1 // pred_region
      _
    $region45: #{tpu_custom_call.1} parent=1 // pred_fallthru
      _
    %v40 = vld [vmem:[%s0] sm:$0xff]
    %v41 = vld [vmem:[%s0 + $0x8] sm:$0xff]
    %v42 = vpack.c.bf16 %v41, %v40
    %v43 = vld [vmem:[%s1] sm:$0xf]
    %v44 = vld [vmem:[%s1 + $0x4] sm:$0x1]
    %v45 = vld [vmem:[%s2] sm:$0x1]
    %v47 = vperm.slane %v45, 0
    %v51 = vunpack.c.l.b16 %v43
    %v52 = vunpack.c.l.b16 %v44
    %v53 = vpack.c.b16 %v52, %v51
    %vm54 = vcmask 80896
    %v56 = vsel %vm54, %v42, 0
    %vm58 = vcmask 1044480
    %v60 = vsel %vm58, %v53, 0
    %62 = vmatpush.bf16.msra.mxu0 0
    %63 = vmatpush.bf16.msra.mxu0 0
    %64 = vmatpush.bf16.msra.mxu0 0
    %65 = vmatpush.bf16.msra.mxu0 0
    %66 = vmatpush.bf16.msra.mxu0 0
    %67 = vmatpush.bf16.msra.mxu0 0
    %68 = vmatpush.bf16.msra.mxu0 0
    %69 = vmatpush.bf16.msra.mxu0 %v60
    %70 = vmatmul.bf16.gmra.mxu0 %v56
    %v71 = vpop.f32.mrf.mxu0
    %v72 = vadd.f32 %v47, %v71
    %v73 = vpop.f32.mrf.mxu0
    %v74 = vadd.f32 %v47, %v73
    %75 = vdwg.mxu0
    %v76 = vmax.f32 %v72, 0.0
    %v77 = vmax.f32 %v74, 0.0
    %v78 = vpack.c.bf16 %v77, %v76
    %v79 = vld [vmem:[%s3] sm:$0xf]
    %v80 = vld [vmem:[%s3 + $0x4] sm:$0xf]
    %v81 = vld [vmem:[%s3 + $0x8] sm:$0xf]
    %v82 = vld [vmem:[%s3 + $0xc] sm:$0xf]
    %v83 = vld [vmem:[%s3 + $0x10] sm:$0xf]
    %v84 = vld [vmem:[%s3 + $0x14] sm:$0xf]
    %v85 = vld [vmem:[%s3 + $0x18] sm:$0xf]
    %v86 = vld [vmem:[%s3 + $0x1c] sm:$0xf]
    %v87 = vld [vmem:[%s3 + $0x20] sm:$0xf]
    %v88 = vld [vmem:[%s3 + $0x24] sm:$0xf]
    %v89 = vld [vmem:[%s3 + $0x28] sm:$0xf]
    %v90 = vld [vmem:[%s3 + $0x2c] sm:$0xf]
    %v91 = vld [vmem:[%s3 + $0x30] sm:$0xf]
    %v92 = vld [vmem:[%s3 + $0x34] sm:$0xf]
    %v93 = vld [vmem:[%s3 + $0x38] sm:$0xf]
    %v94 = vld [vmem:[%s3 + $0x3c] sm:$0xf]
    %v95 = vld [vmem:[%s4] sm:$0x1]
    %v97 = vperm.slane %v95, 0
    %v115 = vunpack.c.l.b16 %v79
    %v116 = vunpack.c.l.b16 %v80
    %v117 = vunpack.c.l.b16 %v81
    %v118 = vunpack.c.l.b16 %v82
    %v119 = vunpack.c.l.b16 %v83
    %v120 = vunpack.c.l.b16 %v84
    %v121 = vunpack.c.l.b16 %v85
    %v122 = vunpack.c.l.b16 %v86
    %v123 = vunpack.c.l.b16 %v87
    %v124 = vunpack.c.l.b16 %v88
    %v125 = vunpack.c.l.b16 %v89
    %v126 = vunpack.c.l.b16 %v90
    %v127 = vunpack.c.l.b16 %v91
    %v128 = vunpack.c.l.b16 %v92
    %v129 = vunpack.c.l.b16 %v93
    %v130 = vunpack.c.l.b16 %v94
    %v131 = vpack.c.b16 %v116, %v115
    %v132 = vpack.c.b16 %v118, %v117
    %v133 = vpack.c.b16 %v120, %v119
    %v134 = vpack.c.b16 %v122, %v121
    %v135 = vpack.c.b16 %v124, %v123
    %v136 = vpack.c.b16 %v126, %v125
    %v137 = vpack.c.b16 %v128, %v127
    %v138 = vpack.c.b16 %v130, %v129
    %147 = vmatpush.bf16.msra.mxu0 %v138
    %148 = vmatpush.bf16.msra.mxu0 %v137
    %149 = vmatpush.bf16.msra.mxu0 %v136
    %150 = vmatpush.bf16.msra.mxu0 %v135
    %151 = vmatpush.bf16.msra.mxu0 %v134
    %152 = vmatpush.bf16.msra.mxu0 %v133
    %153 = vmatpush.bf16.msra.mxu0 %v132
    %154 = vmatpush.bf16.msra.mxu0 %v131
    %155 = vmatmul.bf16.gmra.mxu0 %v78
    %v156 = vpop.f32.mrf.mxu0
    %v157 = vadd.f32 %v97, %v156
    %v158 = vpop.f32.mrf.mxu0
    %v159 = vadd.f32 %v97, %v158
    %160 = vdwg.mxu0
    %v161 = vmax.f32 %v157, 0.0
    %v162 = vmax.f32 %v159, 0.0
    %v163 = vpack.c.bf16 %v162, %v161
    %v164 = vld [vmem:[%s5] sm:$0xf]
    %v165 = vld [vmem:[%s5 + $0x4] sm:$0xf]
    %v166 = vld [vmem:[%s5 + $0x8] sm:$0xf]
    %v167 = vld [vmem:[%s5 + $0xc] sm:$0xf]
    %v168 = vld [vmem:[%s5 + $0x10] sm:$0xf]
    %v169 = vld [vmem:[%s5 + $0x14] sm:$0xf]
    %v170 = vld [vmem:[%s5 + $0x18] sm:$0xf]
    %v171 = vld [vmem:[%s5 + $0x1c] sm:$0xf]
    %v172 = vld [vmem:[%s6] sm:$0x1]
    %v174 = vperm.slane %v172, 0
    %v184 = vunpack.c.l.b16 %v164
    %v185 = vunpack.c.l.b16 %v165
    %v186 = vunpack.c.l.b16 %v166
    %v187 = vunpack.c.l.b16 %v167
    %v188 = vunpack.c.l.b16 %v168
    %v189 = vunpack.c.l.b16 %v169
    %v190 = vunpack.c.l.b16 %v170
    %v191 = vunpack.c.l.b16 %v171
    %v192 = vpack.c.b16 %v185, %v184
    %v193 = vpack.c.b16 %v187, %v186
    %v194 = vpack.c.b16 %v189, %v188
    %v195 = vpack.c.b16 %v191, %v190
    %vm200 = vcmask 523264
    %v202 = vsel %vm200, %v163, 0
    %204 = vmatpush.bf16.msra.mxu0 0
    %205 = vmatpush.bf16.msra.mxu0 0
    %206 = vmatpush.bf16.msra.mxu0 0
    %207 = vmatpush.bf16.msra.mxu0 0
    %208 = vmatpush.bf16.msra.mxu0 %v195
    %209 = vmatpush.bf16.msra.mxu0 %v194
    %210 = vmatpush.bf16.msra.mxu0 %v193
    %211 = vmatpush.bf16.msra.mxu0 %v192
    %212 = vmatmul.bf16.gmra.mxu0 %v202
    %v213 = vpop.f32.mrf.mxu0
    %v214 = vadd.f32 %v174, %v213
    %v215 = vpop.f32.mrf.mxu0
    %v216 = vadd.f32 %v174, %v215
    %217 = vdwg.mxu0
    %v218 = vmax.f32 %v214, 0.0
    %v219 = vmax.f32 %v216, 0.0
    %v220 = vpack.c.bf16 %v219, %v218
    %v221 = vld [vmem:[%s7] sm:$0xf]
    %v222 = vld [vmem:[%s7 + $0x4] sm:$0xf]
    %v223 = vld [vmem:[%s7 + $0x8] sm:$0xf]
    %v224 = vld [vmem:[%s7 + $0xc] sm:$0xf]
    %v225 = vld [vmem:[%s8] sm:$0x1]
    %v227 = vperm.slane %v225, 0
    %v233 = vunpack.c.l.b16 %v221
    %v234 = vunpack.c.l.b16 %v222
    %v235 = vunpack.c.l.b16 %v223
    %v236 = vunpack.c.l.b16 %v224
    %v237 = vpack.c.b16 %v234, %v233
    %v238 = vpack.c.b16 %v236, %v235
    %vm241 = vcmask 261120
    %v243 = vsel %vm241, %v220, 0
    %245 = vmatpush.bf16.msra.mxu0 0
    %246 = vmatpush.bf16.msra.mxu0 0
    %247 = vmatpush.bf16.msra.mxu0 0
    %248 = vmatpush.bf16.msra.mxu0 0
    %249 = vmatpush.bf16.msra.mxu0 0
    %250 = vmatpush.bf16.msra.mxu0 0
    %251 = vmatpush.bf16.msra.mxu0 %v238
    %252 = vmatpush.bf16.msra.mxu0 %v237
    %253 = vmatmul.bf16.gmra.mxu0 %v243
    %v254 = vpop.f32.mrf.mxu0
    %v255 = vadd.f32 %v227, %v254
    %v256 = vpop.f32.mrf.mxu0
    %v257 = vadd.f32 %v227, %v256
    %258 = vdwg.mxu0
    %v259 = vmax.f32 %v255, 0.0
    %v260 = vmax.f32 %v257, 0.0
    %v261 = vpack.c.bf16 %v260, %v259
    %v262 = vld [vmem:[%s9] sm:$0xf]
    %v263 = vld [vmem:[%s9 + $0x4] sm:$0xf]
    %v264 = vld [vmem:[%s10] sm:$0x1]
    %v266 = vperm.slane %v264, 0
    %v270 = vunpack.c.l.b16 %v262
    %v271 = vunpack.c.l.b16 %v263
    %v272 = vpack.c.b16 %v271, %v270
    %vm274 = vcmask 130048
    %v276 = vsel %vm274, %v261, 0
    %278 = vmatpush.bf16.msra.mxu0 0
    %279 = vmatpush.bf16.msra.mxu0 0
    %280 = vmatpush.bf16.msra.mxu0 0
    %281 = vmatpush.bf16.msra.mxu0 0
    %282 = vmatpush.bf16.msra.mxu0 0
    %283 = vmatpush.bf16.msra.mxu0 0
    %284 = vmatpush.bf16.msra.mxu0 0
    %285 = vmatpush.bf16.msra.mxu0 %v272
    %286 = vmatmul.bf16.gmra.mxu0 %v276
    %v287 = vpop.f32.mrf.mxu0
    %v288 = vadd.f32 %v266, %v287
    %v289 = vpop.f32.mrf.mxu0
    %v290 = vadd.f32 %v266, %v289
    %291 = vdwg.mxu0
    %vm292 = vcmask 39936
    %v293 = vsel %vm292, %v288, -inf
    %294 = vmax.xlane.f32.xlu0 %v293
    %v295 = vpop.xlane.xlu0 %294
    %v296 = vsel %vm292, %v290, -inf
    %297 = vmax.xlane.f32.xlu0 %v296
    %v298 = vpop.xlane.xlu0 %297
    %v299 = vsub.f32 %v288, %v295
    %v300 = vsub.f32 %v290, %v298
    %v301 = vmul.f32 %v299, 1.442695
    %v302 = vpow.pop %v301
    %v303 = vmul.f32 %v300, 1.442695
    %v304 = vpow.pop %v303
    %v305 = vsel %vm292, %v302, 0.0
    %306 = vadd.xlane.f32.xlu0 %v305
    %v307 = vpop.xlane.xlu0 %306
    %v308 = vsel %vm292, %v304, 0.0
    %309 = vadd.xlane.f32.xlu0 %v308
    %v310 = vpop.xlane.xlu0 %309
    %v311 = vrcp.pop %v307
    %v312 = vmul.f32 %v307, %v311
    %v313 = vsub.f32 1.0, %v312
    %v314 = vmul.f32 %v311, %v313
    %v315 = vadd.f32 %v311, %v314
    %vm316 = vweird.f32 %v307
    %vm317 = vweird.f32 %v311
    %vm318 = vmor %vm316, %vm317
    %v319 = vsel %vm318, %v311, %v315
    %v320 = vand.u32 2147483647, %v307
    %vm321 = vcmp.eq.f32.partialorder %v320, 8.507059e+37
    %v322 = vand.u32 %v307, 2147483648
    %v323 = vor.u32 1.1754944e-38, %v322
    %v324 = vsel %vm321, %v323, %v319
    %v325 = vmul.f32 %v302, %v324
    %v326 = vrcp.pop %v310
    %v327 = vmul.f32 %v310, %v326
    %v328 = vsub.f32 1.0, %v327
    %v329 = vmul.f32 %v326, %v328
    %v330 = vadd.f32 %v326, %v329
    %vm331 = vweird.f32 %v310
    %vm332 = vweird.f32 %v326
    %vm333 = vmor %vm331, %vm332
    %v334 = vsel %vm333, %v326, %v330
    %v335 = vand.u32 2147483647, %v310
    %vm336 = vcmp.eq.f32.partialorder %v335, 8.507059e+37
    %v337 = vand.u32 %v310, 2147483648
    %v338 = vor.u32 1.1754944e-38, %v337
    %v339 = vsel %vm336, %v338, %v334
    %v340 = vmul.f32 %v304, %v339
    %341 = vst.msk [vmem:[#allocation2] sm:$0xff] %vm292, %v325
    %342 = vst.msk [vmem:[#allocation2 + $0x8] sm:$0xff] %vm292, %v340
    // Predicated region
    $region46: #{tpu_custom_call.1} parent=1 // pred_check
      _
    $region47: #{tpu_custom_call.1} parent=1 // pred_check_branch
      %344 = sbr.rel (0) target = $region49
    $region48: #{tpu_custom_call.1} parent=1 // pred_region
      %346 = vsyncadd [#allocation3], 128
      %s347 = sshll.u32 [#allocation2], 4
      %s348 = int_to_ptr.vmem [resolvable:$true] %s347
      %s349 = sshll.u32 %s11, 4
      %s350 = int_to_ptr.hbm [resolvable:$true] %s349
      %355 = dma.vmem_to_hbm [thread:$0]  %s348, 128, %s350, [#allocation3], 128, 128, 8
    $region49: #{tpu_custom_call.1} parent=1 // pred_fallthru
      _
    // Predicated region
    $region50: #{tpu_custom_call.1} parent=1 // pred_check
      _
    $region51: #{tpu_custom_call.1} parent=1 // pred_check_branch
      %357 = sbr.rel (0) target = $region53
    $region52: #{tpu_custom_call.1} parent=1 // pred_region
      %359 = dma.done [#allocation3], 256
    $region53: #{tpu_custom_call.1} parent=1 // pred_fallthru
      _
    %360 = vsyncpa [#allocation3], 1

</llo_original>
